<compile_context>
chip_gen: v7x
topology: tpu7x:2x2x1
jax: 0.10.0
libtpu: 0.0.40
codegen_flags: <defaults>
</compile_context>

<pallas_src>
import jax
import jax.numpy as jnp
from jax.experimental import pallas as pl
from jax.experimental.pallas import tpu as pltpu

IN_FEATURES = 103     # front input features
HID_FEATURES = 64     # front output features
END_OUT = 10          # end (head) output features
HID_PAD = 128         # lane-dense padded hidden width
OUT_PAD = 128         # lane-dense padded output width
DEFAULT_TILE_B = 1024  # rows per grid step (multiple of 8); ~2 KB/row double-buffered


def _round_up(n, m):
    return ((n + m - 1) // m) * m


def _concat_teacher_kernel(x_ref, w1_ref, b1_ref, w2_ref, b2_ref, o_ref):
    # x_ref: (TB, 103)  w1_ref: (103, 128)  b1_ref: (1, 128)
    # w2_ref: (128, 128) b2_ref: (1, 128)   o_ref: (TB, 128)
    h = jnp.dot(x_ref[...], w1_ref[...], preferred_element_type=jnp.float32)
    h = jnp.maximum(h + b1_ref[...], 0.0)          # ReLU; Dropout(p=0.1) == identity (eval)
    y = jnp.dot(h.astype(w2_ref.dtype), w2_ref[...], preferred_element_type=jnp.float32)
    o_ref[...] = (y + b2_ref[...]).astype(o_ref.dtype)


def pack_params(w1, b1, w2, b2):
    """Pre-transpose + zero-pad parameters once (PyTorch layouts in, kernel layouts out).

    w1: (64, 103), b1: (64,), w2: (10, 64), b2: (10,)
    """
    w1t = jnp.zeros((IN_FEATURES, HID_PAD), jnp.float32)
    w1t = w1t.at[:, :HID_FEATURES].set(w1.T.astype(jnp.float32))
    b1p = jnp.zeros((1, HID_PAD), jnp.float32).at[0, :HID_FEATURES].set(b1.astype(jnp.float32))
    w2t = jnp.zeros((HID_PAD, OUT_PAD), jnp.float32)
    w2t = w2t.at[:HID_FEATURES, :END_OUT].set(w2.T.astype(jnp.float32))
    b2p = jnp.zeros((1, OUT_PAD), jnp.float32).at[0, :END_OUT].set(b2.astype(jnp.float32))
    return w1t, b1p, w2t, b2p


def concat_teacher_forward(x, packed_params, *, tile_b=DEFAULT_TILE_B):
    """x: (B, 103) float32; packed_params from pack_params()."""
    w1t, b1p, w2t, b2p = packed_params
    B = x.shape[0]

    # Tile rows: multiple of 8, never larger than the (rounded) batch.
    tile_b = max(8, min(_round_up(tile_b, 8), _round_up(B, 8)))
    num_tiles = pl.cdiv(B, tile_b)
    Bp = num_tiles * tile_b
    if Bp != B:
        x = jnp.pad(x, ((0, Bp - B), (0, 0)))      # padded rows are discarded below

    itemsize = jnp.dtype(x.dtype).itemsize
    cost = pl.CostEstimate(
        flops=2 * Bp * (IN_FEATURES * HID_PAD + HID_PAD * OUT_PAD),
        transcendentals=0,
        bytes_accessed=(Bp * IN_FEATURES + Bp * OUT_PAD) * itemsize
        + (IN_FEATURES * HID_PAD + HID_PAD * OUT_PAD + 2 * HID_PAD) * 4,
    )

    out = pl.pallas_call(
        _concat_teacher_kernel,
        out_shape=jax.ShapeDtypeStruct((Bp, OUT_PAD), x.dtype),
        grid=(num_tiles,),
        in_specs=[
            pl.BlockSpec((tile_b, IN_FEATURES), lambda i: (i, 0)),
            pl.BlockSpec((IN_FEATURES, HID_PAD), lambda i: (0, 0)),
            pl.BlockSpec((1, HID_PAD), lambda i: (0, 0)),
            pl.BlockSpec((HID_PAD, OUT_PAD), lambda i: (0, 0)),
            pl.BlockSpec((1, OUT_PAD), lambda i: (0, 0)),
        ],
        out_specs=pl.BlockSpec((tile_b, OUT_PAD), lambda i: (i, 0)),
        compiler_params=pltpu.CompilerParams(
            dimension_semantics=("parallel",),
        ),
        cost_estimate=cost,
    )(x, w1t, b1p, w2t, b2p)

    return out[:B, :END_OUT]


def init_params(key):
    """Deterministic init matching nn.Linear(103,64) and nn.Linear(64,10) shapes."""
    k1w, k1b, k2w, k2b = jax.random.split(key, 4)
    bound1 = 1.0 / (IN_FEATURES ** 0.5)
    bound2 = 1.0 / (HID_FEATURES ** 0.5)
    w1 = jax.random.uniform(k1w, (HID_FEATURES, IN_FEATURES), jnp.float32, -bound1, bound1)
    b1 = jax.random.uniform(k1b, (HID_FEATURES,), jnp.float32, -bound1, bound1)
    w2 = jax.random.uniform(k2w, (END_OUT, HID_FEATURES), jnp.float32, -bound2, bound2)
    b2 = jax.random.uniform(k2b, (END_OUT,), jnp.float32, -bound2, bound2)
    return w1, b1, w2, b2


if __name__ == "__main__":
    key = jax.random.PRNGKey(0)
    k_x, k_p = jax.random.split(key)

    # Small, deterministic example: ragged batch (B=20) with a small tile (8)
    # so the run exercises the grid (3 steps), partial-batch padding and slicing.
    B = 20
    x = jax.random.normal(k_x, (B, IN_FEATURES), jnp.float32)
    w1, b1, w2, b2 = init_params(k_p)
    packed = pack_params(w1, b1, w2, b2)

    out = concat_teacher_forward(x, packed, tile_b=8)
    out = jax.block_until_ready(out)

    # Plain-JAX reference: end(front(x)) with eval-mode dropout == identity.
    h_ref = jnp.maximum(x @ w1.T + b1, 0.0)
    ref = h_ref @ w2.T + b2

    assert out.shape == (B, END_OUT)
    assert jnp.allclose(out, ref, atol=1e-4, rtol=1e-4)

    print("KERNEL_OK")
</pallas_src>

<mosaic_0001>
module attributes {stable_mosaic.version = 11 : i64} {
  func.func @_concat_teacher_kernel(%arg0: i32, %arg1: memref<8x103xf32, #tpu.memory_space<vmem>>, %arg2: memref<103x128xf32, #tpu.memory_space<vmem>>, %arg3: memref<1x128xf32, #tpu.memory_space<vmem>>, %arg4: memref<128x128xf32, #tpu.memory_space<vmem>>, %arg5: memref<1x128xf32, #tpu.memory_space<vmem>>, %arg6: memref<8x128xf32, #tpu.memory_space<vmem>>) attributes {dimension_semantics = [#tpu.dimension_semantics<parallel>], iteration_bounds = array<i64: 3>, scalar_prefetch = 0 : i64, scratch_operands = 0 : i64, tpu.core_type = #tpu.core_type<tc>, window_params = [{transform_indices = @transform_0, window_bounds = array<i64: 8, 103>}, {pipeline_mode = #tpu.pipeline_mode<synchronous>, transform_indices = @transform_1, window_bounds = array<i64: 103, 128>}, {pipeline_mode = #tpu.pipeline_mode<synchronous>, transform_indices = @transform_2, window_bounds = array<i64: 1, 128>}, {pipeline_mode = #tpu.pipeline_mode<synchronous>, transform_indices = @transform_3, window_bounds = array<i64: 128, 128>}, {pipeline_mode = #tpu.pipeline_mode<synchronous>, transform_indices = @transform_4, window_bounds = array<i64: 1, 128>}, {transform_indices = @transform_5, window_bounds = array<i64: 8, 128>}]} {
    %c0 = arith.constant 0 : index
    %c0_0 = arith.constant 0 : index
    %0 = vector.load %arg1[%c0, %c0_0] : memref<8x103xf32, #tpu.memory_space<vmem>>, vector<8x103xf32>
    %c0_1 = arith.constant 0 : index
    %c0_2 = arith.constant 0 : index
    %1 = vector.load %arg2[%c0_1, %c0_2] : memref<103x128xf32, #tpu.memory_space<vmem>>, vector<103x128xf32>
    %cst = arith.constant dense<0.000000e+00> : vector<8x128xf32>
    %2 = tpu.matmul %0, %1, %cst {dimension_numbers = #tpu.dot_dimension_numbers<[1], [0], [0], [1], [0, 0, 1, 1], [], []>} : vector<8x103xf32>, vector<103x128xf32>, vector<8x128xf32> -> vector<8x128xf32>
    %c0_3 = arith.constant 0 : index
    %c0_4 = arith.constant 0 : index
    %3 = vector.load %arg3[%c0_3, %c0_4] : memref<1x128xf32, #tpu.memory_space<vmem>>, vector<1x128xf32>
    %4 = vector.broadcast %3 : vector<1x128xf32> to vector<8x128xf32>
    %5 = arith.addf %2, %4 : vector<8x128xf32>
    %cst_5 = arith.constant 0.000000e+00 : f32
    %6 = vector.broadcast %cst_5 : f32 to vector<8x128xf32>
    %7 = arith.maximumf %5, %6 : vector<8x128xf32>
    %c0_6 = arith.constant 0 : index
    %c0_7 = arith.constant 0 : index
    %8 = vector.load %arg4[%c0_6, %c0_7] : memref<128x128xf32, #tpu.memory_space<vmem>>, vector<128x128xf32>
    %cst_8 = arith.constant dense<0.000000e+00> : vector<8x128xf32>
    %9 = tpu.matmul %7, %8, %cst_8 {dimension_numbers = #tpu.dot_dimension_numbers<[1], [0], [0], [1], [0, 0, 1, 1], [], []>} : vector<8x128xf32>, vector<128x128xf32>, vector<8x128xf32> -> vector<8x128xf32>
    %c0_9 = arith.constant 0 : index
    %c0_10 = arith.constant 0 : index
    %10 = vector.load %arg5[%c0_9, %c0_10] : memref<1x128xf32, #tpu.memory_space<vmem>>, vector<1x128xf32>
    %11 = vector.broadcast %10 : vector<1x128xf32> to vector<8x128xf32>
    %12 = arith.addf %9, %11 : vector<8x128xf32>
    %c0_11 = arith.constant 0 : index
    %c0_12 = arith.constant 0 : index
    %13 = vector.load %arg6[%c0_11, %c0_12] : memref<8x128xf32, #tpu.memory_space<vmem>>, vector<8x128xf32>
    tpu.vector_store %arg6[%c0_11, %c0_12], %12 {strides = array<i32>} : memref<8x128xf32, #tpu.memory_space<vmem>>, vector<8x128xf32>,
    return
  }
  func.func @transform_0(%arg0: i32) -> (i32, i32) {
    %c0_i32 = arith.constant 0 : i32
    %c0_i32_0 = arith.constant 0 : i32
    return %arg0, %c0_i32 : i32, i32
  }
  func.func @transform_1(%arg0: i32) -> (i32, i32) {
    %c0_i32 = arith.constant 0 : i32
    %c0_i32_0 = arith.constant 0 : i32
    %c0_i32_1 = arith.constant 0 : i32
    return %c0_i32, %c0_i32_0 : i32, i32
  }
  func.func @transform_2(%arg0: i32) -> (i32, i32) {
    %c0_i32 = arith.constant 0 : i32
    %c0_i32_0 = arith.constant 0 : i32
    %c0_i32_1 = arith.constant 0 : i32
    return %c0_i32, %c0_i32_0 : i32, i32
  }
  func.func @transform_3(%arg0: i32) -> (i32, i32) {
    %c0_i32 = arith.constant 0 : i32
    %c0_i32_0 = arith.constant 0 : i32
    %c0_i32_1 = arith.constant 0 : i32
    return %c0_i32, %c0_i32_0 : i32, i32
  }
  func.func @transform_4(%arg0: i32) -> (i32, i32) {
    %c0_i32 = arith.constant 0 : i32
    %c0_i32_0 = arith.constant 0 : i32
    %c0_i32_1 = arith.constant 0 : i32
    return %c0_i32, %c0_i32_0 : i32, i32
  }
  func.func @transform_5(%arg0: i32) -> (i32, i32) {
    %c0_i32 = arith.constant 0 : i32
    %c0_i32_0 = arith.constant 0 : i32
    return %arg0, %c0_i32 : i32, i32
  }
}

</mosaic_0001>

<llo_original>
// kernel: tpu_custom_call.1
$region0: #{tpu_custom_call.1}
  #allocation0 [shape = 'u32[]', space=smem, size = 0x4, offset = 0x4, fixed_abs, tag = 'smem constant byte address 0x4 - core index']
  #allocation1 [shape = 'u32[144,128]{1,0:T(1,128)}', space=vmem, size = 0x12000, scoped, tag = 'internal scratch']
  %s0 = inlined_call_operand.hbm [shape: f32[24,103], index: 0, kind: input, shape index: {}]
  %s1 = inlined_call_operand.hbm [shape: f32[103,128], index: 1, kind: input, shape index: {}]
  %s2 = inlined_call_operand.vmem [shape: f32[1,128], index: 2, kind: input, shape index: {}]
  %s3 = inlined_call_operand.hbm [shape: f32[128,128], index: 3, kind: input, shape index: {}]
  %s4 = inlined_call_operand.vmem [shape: f32[1,128], index: 4, kind: input, shape index: {}]
  %s5 = inlined_call_operand.hbm [shape: f32[24,128], index: 5, kind: output, shape index: {}]
  %s6 = sld [smem:[#allocation0]]
  $region65: #{tpu_custom_call.1} parent=0
    _
  %s8 = ssub.s32 1, %s6
  %s9 = scalar_select 0, %s8, %s6
  $region1: #{tpu_custom_call.1} parent=0
    #allocation2 [shape = 'u8[8192]{0}', space=vmem, size = 0x2000, scoped, tag = 'input window, operand 0']
    #allocation3 [shape = 's32[2]{0}', space=sflag, size = 0x8, scoped, tag = 'scoped memory for tpu_custom_call.1']
    #allocation4 [shape = 's32[2]{0}', space=sflag, size = 0x8, scoped, tag = 'scoped memory for tpu_custom_call.1']
    #allocation5 [shape = 'u8[53248]{0}', space=vmem, size = 0xd000, scoped, tag = 'input window, operand 1, single buffered']
    #allocation6 [shape = 's32[1]{0}', space=sflag, size = 0x4, scoped, tag = 'scoped memory for tpu_custom_call.1']
    #allocation7 [shape = 'u8[65536]{0}', space=vmem, size = 0x10000, scoped, tag = 'input window, operand 3, single buffered']
    #allocation8 [shape = 'u8[8192]{0}', space=vmem, size = 0x2000, scoped, tag = 'output window, operand 0']
    %10 = vsyncpa [#allocation3], 0
    %s11 = scalar_lea.sflag [#allocation3], 1
    %12 = vsyncpa %s11, 0
    %13 = vsyncpa [#allocation6], 0
    %14 = vsyncpa [#allocation4], 0
    %s15 = scalar_lea.sflag [#allocation4], 1
    %16 = vsyncpa %s15, 0
    loop: start=0, step=1, limit=5
    $region2: #{tpu_custom_call.1} parent=1 // loop_pre_header
      _
    $region3: #{tpu_custom_call.1} parent=1 // loop_header
      %s18 = sphi 0, %s22
      %p19 = scmp.ge.s32.totalorder %s18, 5
      %s28 = sphi 0, %s30
      %s31 = sphi 0, %s28
      %s32 = sphi 0, %s31
      %s48 = sphi 0, %s32
      %s52 = sphi 0, %s52
      %s54 = sphi 0, %s52
      %s55 = sphi 0, %s54
      %s69 = sphi 0, %s55
      %s73 = sphi 0, %s73
      %s75 = sphi 0, %s73
      %s76 = sphi 0, %s75
      %s90 = sphi 0, %s76
      %s94 = sphi 0, %s94
      %s96 = sphi 0, %s94
      %s97 = sphi 0, %s96
      %s111 = sphi 0, %s97
      %s115 = sphi 0, %s115
      %s117 = sphi 0, %s115
      %s118 = sphi 0, %s117
      %s132 = sphi 0, %s118
      %s138 = sphi 0, %s140
      %s141 = sphi 0, %s138
      %s142 = sphi 0, %s141
      %s158 = sphi 0, %s142
    $region4: #{tpu_custom_call.1} parent=1 // loop_header_branch
      %21 = sbr.rel (%p19) target = $region8
    $region5: #{tpu_custom_call.1} parent=1 // loop_body
      %s23 = ssub.s32 %s18, 1
      %s24 = ssub.s32 %s18, 2
      %s25 = sadd.s32 %s18, 1
      %s26 = ssub.s32 %s18, %s25
      %p27 = scmp.eq.s32.totalorder %s26, 0
      %s29 = sadd.s32 %s28, 1
      %s30 = scalar_select %p27, %s28, %s29
      %p33 = pneg %p27
      %p34 = scmp.eq.s32.totalorder %s18, 2
      %p35 = por %p33, %p34
      %p36 = scmp.ne.s32.totalorder %s28, %s31
      %p37 = scmp.eq.s32.totalorder %s18, 0
      %p38 = por %p36, %p37
      %p39 = scmp.ne.s32.totalorder %s28, %s31
      %p40 = scmp.eq.s32.totalorder %s23, 2
      %p41 = por %p39, %p40
      %p42 = scmp.ne.s32.totalorder %s31, %s32
      %p43 = scmp.eq.s32.totalorder %s23, 0
      %p44 = por %p42, %p43
      %p45 = scmp.ne.s32.totalorder %s31, %s32
      %p46 = scmp.eq.s32.totalorder %s24, 2
      %p47 = por %p45, %p46
      %p49 = scmp.ne.s32.totalorder %s32, %s48
      %p50 = scmp.eq.s32.totalorder %s24, 0
      %p51 = por %p49, %p50
      %s53 = sadd.s32 %s52, 1
      %p56 = scmp.eq.s32.totalorder %s18, 2
      %p57 = scmp.ne.s32.totalorder %s52, %s54
      %p58 = scmp.eq.s32.totalorder %s18, 0
      %p59 = por %p57, %p58
      %p60 = scmp.ne.s32.totalorder %s52, %s54
      %p61 = scmp.eq.s32.totalorder %s23, 2
      %p62 = por %p60, %p61
      %p63 = scmp.ne.s32.totalorder %s54, %s55
      %p64 = scmp.eq.s32.totalorder %s23, 0
      %p65 = por %p63, %p64
      %p66 = scmp.ne.s32.totalorder %s54, %s55
      %p67 = scmp.eq.s32.totalorder %s24, 2
      %p68 = por %p66, %p67
      %p70 = scmp.ne.s32.totalorder %s55, %s69
      %p71 = scmp.eq.s32.totalorder %s24, 0
      %p72 = por %p70, %p71
      %s74 = sadd.s32 %s73, 1
      %p77 = scmp.eq.s32.totalorder %s18, 2
      %p78 = scmp.ne.s32.totalorder %s73, %s75
      %p79 = scmp.eq.s32.totalorder %s18, 0
      %p80 = por %p78, %p79
      %p81 = scmp.ne.s32.totalorder %s73, %s75
      %p82 = scmp.eq.s32.totalorder %s23, 2
      %p83 = por %p81, %p82
      %p84 = scmp.ne.s32.totalorder %s75, %s76
      %p85 = scmp.eq.s32.totalorder %s23, 0
      %p86 = por %p84, %p85
      %p87 = scmp.ne.s32.totalorder %s75, %s76
      %p88 = scmp.eq.s32.totalorder %s24, 2
      %p89 = por %p87, %p88
      %p91 = scmp.ne.s32.totalorder %s76, %s90
      %p92 = scmp.eq.s32.totalorder %s24, 0
      %p93 = por %p91, %p92
      %s95 = sadd.s32 %s94, 1
      %p98 = scmp.eq.s32.totalorder %s18, 2
      %p99 = scmp.ne.s32.totalorder %s94, %s96
      %p100 = scmp.eq.s32.totalorder %s18, 0
      %p101 = por %p99, %p100
      %p102 = scmp.ne.s32.totalorder %s94, %s96
      %p103 = scmp.eq.s32.totalorder %s23, 2
      %p104 = por %p102, %p103
      %p105 = scmp.ne.s32.totalorder %s96, %s97
      %p106 = scmp.eq.s32.totalorder %s23, 0
      %p107 = por %p105, %p106
      %p108 = scmp.ne.s32.totalorder %s96, %s97
      %p109 = scmp.eq.s32.totalorder %s24, 2
      %p110 = por %p108, %p109
      %p112 = scmp.ne.s32.totalorder %s97, %s111
      %p113 = scmp.eq.s32.totalorder %s24, 0
      %p114 = por %p112, %p113
      %s116 = sadd.s32 %s115, 1
      %p119 = scmp.eq.s32.totalorder %s18, 2
      %p120 = scmp.ne.s32.totalorder %s115, %s117
      %p121 = scmp.eq.s32.totalorder %s18, 0
      %p122 = por %p120, %p121
      %p123 = scmp.ne.s32.totalorder %s115, %s117
      %p124 = scmp.eq.s32.totalorder %s23, 2
      %p125 = por %p123, %p124
      %p126 = scmp.ne.s32.totalorder %s117, %s118
      %p127 = scmp.eq.s32.totalorder %s23, 0
      %p128 = por %p126, %p127
      %p129 = scmp.ne.s32.totalorder %s117, %s118
      %p130 = scmp.eq.s32.totalorder %s24, 2
      %p131 = por %p129, %p130
      %p133 = scmp.ne.s32.totalorder %s118, %s132
      %p134 = scmp.eq.s32.totalorder %s24, 0
      %p135 = por %p133, %p134
      %s136 = ssub.s32 %s18, %s25
      %p137 = scmp.eq.s32.totalorder %s136, 0
      %s139 = sadd.s32 %s138, 1
      %s140 = scalar_select %p137, %s138, %s139
      %p143 = pneg %p137
      %p144 = scmp.eq.s32.totalorder %s18, 2
      %p145 = por %p143, %p144
      %p146 = scmp.ne.s32.totalorder %s138, %s141
      %p147 = scmp.eq.s32.totalorder %s18, 0
      %p148 = por %p146, %p147
      %p149 = scmp.ne.s32.totalorder %s138, %s141
      %p150 = scmp.eq.s32.totalorder %s23, 2
      %p151 = por %p149, %p150
      %p152 = scmp.ne.s32.totalorder %s141, %s142
      %p153 = scmp.eq.s32.totalorder %s23, 0
      %p154 = por %p152, %p153
      %p155 = scmp.ne.s32.totalorder %s141, %s142
      %p156 = scmp.eq.s32.totalorder %s24, 2
      %p157 = por %p155, %p156
      %p159 = scmp.ne.s32.totalorder %s142, %s158
      %p160 = scmp.eq.s32.totalorder %s24, 0
      %p161 = por %p159, %p160
      %p162 = scmp.le.s32.totalorder 1, %s18
      %p163 = scmp.lt.s32.totalorder %s18, 4
      %p164 = pnand %p162, %p163
      %p165 = pneg %p164
      // Predicated region
      $region9: #{tpu_custom_call.1} parent=5 // pred_check
        _
      $region10: #{tpu_custom_call.1} parent=5 // pred_check_branch
        %167 = sbr.rel (%p164) target = $region12
      $region11: #{tpu_custom_call.1} parent=5 // pred_region
        %s168 = ssub.s32 %s18, 1
        // Predicated region
        $region13: #{tpu_custom_call.1} parent=11 // pred_check
          %p169 = pneg %p65
        $region14: #{tpu_custom_call.1} parent=11 // pred_check_branch
          %171 = sbr.rel (%p169) target = $region16
        $region15: #{tpu_custom_call.1} parent=11 // pred_region
          %s173 = ssub.s32 1664, 1664
          %174 = vsyncadd [#allocation6], %s173
          %s175 = sshll.u32 [#allocation5], 4
          %s176 = int_to_ptr.vmem [resolvable:$true] %s175
          %181 = dma.hbm_to_vmem [thread:$0]  %s1, 1664, %s176, [#allocation6], 128, 128, 8
        $region16: #{tpu_custom_call.1} parent=11 // pred_fallthru
          _
        // Predicated region
        $region17: #{tpu_custom_call.1} parent=11 // pred_check
          %p182 = pneg %p86
        $region18: #{tpu_custom_call.1} parent=11 // pred_check_branch
          %184 = sbr.rel (%p182) target = $region20
        $region19: #{tpu_custom_call.1} parent=11 // pred_region
          _
        $region20: #{tpu_custom_call.1} parent=11 // pred_fallthru
          _
        // Predicated region
        $region21: #{tpu_custom_call.1} parent=11 // pred_check
          %p185 = pneg %p107
        $region22: #{tpu_custom_call.1} parent=11 // pred_check_branch
          %187 = sbr.rel (%p185) target = $region24
        $region23: #{tpu_custom_call.1} parent=11 // pred_region
          %s189 = ssub.s32 2048, 2048
          %190 = vsyncadd [#allocation6], %s189
          %s191 = sshll.u32 [#allocation7], 4
          %s192 = int_to_ptr.vmem [resolvable:$true] %s191
          %197 = dma.hbm_to_vmem [thread:$0]  %s3, 2048, %s192, [#allocation6], 128, 128, 8
        $region24: #{tpu_custom_call.1} parent=11 // pred_fallthru
          _
        // Predicated region
        $region25: #{tpu_custom_call.1} parent=11 // pred_check
          %p198 = pneg %p128
        $region26: #{tpu_custom_call.1} parent=11 // pred_check_branch
          %200 = sbr.rel (%p198) target = $region28
        $region27: #{tpu_custom_call.1} parent=11 // pred_region
          _
        $region28: #{tpu_custom_call.1} parent=11 // pred_fallthru
          _
      $region12: #{tpu_custom_call.1} parent=5 // pred_fallthru
        _
      %p201 = scmp.lt.s32.totalorder %s18, 3
      // Predicated region
      $region29: #{tpu_custom_call.1} parent=5 // pred_check
        %p202 = pneg %p201
      $region30: #{tpu_custom_call.1} parent=5 // pred_check_branch
        %204 = sbr.rel (%p202) target = $region32
      $region31: #{tpu_custom_call.1} parent=5 // pred_region
        // Predicated region
        $region33: #{tpu_custom_call.1} parent=31 // pred_check
          %p205 = pneg %p38
        $region34: #{tpu_custom_call.1} parent=31 // pred_check_branch
          %207 = sbr.rel (%p205) target = $region36
        $region35: #{tpu_custom_call.1} parent=31 // pred_region
          %s208 = sand.u32 %s28, 1
          %s209 = scalar_lea.sflag [#allocation3], %s208
          %s210 = sand.u32 %s28, 1
          %s211 = smul.addr %s210, 8
          %s212 = scalar_lea.vmem [#allocation2], %s211
          %s214 = ssub.s32 128, 128
          %215 = vsyncadd %s209, %s214
          %s216 = smul.addr %s18, 128
          %s217 = scalar_lea.hbm %s0, %s216
          %s219 = sshll.u32 %s212, 4
          %s220 = int_to_ptr.vmem [resolvable:$true] %s219
          %222 = dma.hbm_to_vmem [thread:$0]  %s217, 128, %s220, %s209
        $region36: #{tpu_custom_call.1} parent=31 // pred_fallthru
          _
      $region32: #{tpu_custom_call.1} parent=5 // pred_fallthru
        _
      %p223 = scmp.le.s32.totalorder 1, %s18
      %p224 = scmp.lt.s32.totalorder %s18, 4
      %p225 = pnand %p223, %p224
      %p226 = pneg %p225
      // Predicated region
      $region37: #{tpu_custom_call.1} parent=5 // pred_check
        _
      $region38: #{tpu_custom_call.1} parent=5 // pred_check_branch
        %228 = sbr.rel (%p225) target = $region40
      $region39: #{tpu_custom_call.1} parent=5 // pred_region
        %s229 = ssub.s32 %s18, 1
        %s230 = sand.u32 %s31, 1
        %s231 = scalar_lea.sflag [#allocation3], %s230
        %s232 = sand.u32 %s31, 1
        %s233 = smul.addr %s232, 8
        %s234 = scalar_lea.vmem [#allocation2], %s233
        // Predicated region
        $region41: #{tpu_custom_call.1} parent=39 // pred_check
          %p235 = pneg %p44
        $region42: #{tpu_custom_call.1} parent=39 // pred_check_branch
          %237 = sbr.rel (%p235) target = $region44
        $region43: #{tpu_custom_call.1} parent=39 // pred_region
          %238 = dma.done %s231, 128
        $region44: #{tpu_custom_call.1} parent=39 // pred_fallthru
          _
        // Predicated region
        $region45: #{tpu_custom_call.1} parent=39 // pred_check
          %p239 = pneg %p65
        $region46: #{tpu_custom_call.1} parent=39 // pred_check_branch
          %241 = sbr.rel (%p239) target = $region48
        $region47: #{tpu_custom_call.1} parent=39 // pred_region
          %242 = dma.done [#allocation6], 1664
        $region48: #{tpu_custom_call.1} parent=39 // pred_fallthru
          _
        // Predicated region
        $region49: #{tpu_custom_call.1} parent=39 // pred_check
          %p243 = pneg %p107
        $region50: #{tpu_custom_call.1} parent=39 // pred_check_branch
          %245 = sbr.rel (%p243) target = $region52
        $region51: #{tpu_custom_call.1} parent=39 // pred_region
          %246 = dma.done [#allocation6], 2048
        $region52: #{tpu_custom_call.1} parent=39 // pred_fallthru
          _
        %s247 = sand.u32 %s31, 1
        %s248 = scalar_lea.sflag [#allocation3], %s247
        %s249 = sand.u32 %s31, 1
        %s250 = smul.addr %s249, 8
        %s251 = scalar_lea.vmem [#allocation2], %s250
        %p252 = pneg %p44
        %p253 = pneg %p41
        %p254 = pneg %p65
        %p255 = pneg %p62
        %p256 = pneg %p86
        %p257 = pneg %p83
        %p258 = pneg %p107
        %p259 = pneg %p104
        %p260 = pneg %p128
        %p261 = pneg %p125
        %p262 = pneg %p154
        %p263 = pneg %p151
        %s264 = sand.u32 %s141, 1
        %s265 = scalar_lea.sflag [#allocation4], %s264
        %s266 = sand.u32 %s141, 1
        %s267 = smul.addr %s266, 8
        %s268 = scalar_lea.vmem [#allocation8], %s267
        %v269 = vld [vmem:[%s234] sm:$0xff]
        %v270 = vld [vmem:[#allocation5] sm:$0xff]
        %v271 = vld [vmem:[#allocation5 + $0x8] sm:$0xff]
        %v272 = vld [vmem:[#allocation5 + $0x10] sm:$0xff]
        %v273 = vld [vmem:[#allocation5 + $0x18] sm:$0xff]
        %v274 = vld [vmem:[#allocation5 + $0x20] sm:$0xff]
        %v275 = vld [vmem:[#allocation5 + $0x28] sm:$0xff]
        %v276 = vld [vmem:[#allocation5 + $0x30] sm:$0xff]
        %v277 = vld [vmem:[#allocation5 + $0x38] sm:$0xff]
        %v278 = vld [vmem:[#allocation5 + $0x40] sm:$0xff]
        %v279 = vld [vmem:[#allocation5 + $0x48] sm:$0xff]
        %v280 = vld [vmem:[#allocation5 + $0x50] sm:$0xff]
        %v281 = vld [vmem:[#allocation5 + $0x58] sm:$0xff]
        %v282 = vld [vmem:[#allocation5 + $0x60] sm:$0x7f]
        %v283 = vld [vmem:[%s2] sm:$0x1]
        %v285 = vlaneseq
        %v286 = vshrl.u32 %v285, 7
        %v287 = vsub.s32 0, %v286
        %v288 = vrot.slane %v283, %v287
        %vm290 = vcmask 842752
        %v292 = vsel %vm290, %v269, 0
        %vm294 = vcmask 1046528
        %v296 = vsel %vm294, %v282, 0
        %298 = vmatprep.subr.mxu0 0.0
        %299 = vmatpush1.msra.mxu0 %v270
        %300 = vmatprep.subr.mxu0 0.0
        %301 = vmatpush1.msra.mxu0 %v271
        %302 = vmatprep.subr.mxu0 0.0
        %303 = vmatpush1.msra.mxu0 %v272
        %304 = vmatprep.subr.mxu0 0.0
        %305 = vmatpush1.msra.mxu0 %v273
        %306 = vmatprep.subr.mxu0 0.0
        %307 = vmatpush1.msra.mxu0 %v274
        %308 = vmatprep.subr.mxu0 0.0
        %309 = vmatpush1.msra.mxu0 %v275
        %310 = vmatprep.subr.mxu0 0.0
        %311 = vmatpush1.msra.mxu0 %v276
        %312 = vmatprep.subr.mxu0 0.0
        %313 = vmatpush1.msra.mxu0 %v277
        %314 = vmatprep.subr.mxu0 0.0
        %315 = vmatpush1.msra.mxu0 %v278
        %316 = vmatprep.subr.mxu0 0.0
        %317 = vmatpush1.msra.mxu0 %v279
        %318 = vmatprep.subr.mxu0 0.0
        %319 = vmatpush1.msra.mxu0 %v280
        %320 = vmatprep.subr.mxu0 0.0
        %321 = vmatpush1.msra.mxu0 %v281
        %322 = vmatprep.subr.mxu0 0.0
        %323 = vmatpush1.msra.mxu0 %v296
        %324 = vmatprep.subr.mxu0 0.0
        %325 = vmatpush1.msra.mxu0 0.0
        %326 = vmatprep.subr.mxu0 0.0
        %327 = vmatpush1.msra.mxu0 0.0
        %328 = vmatprep.subr.mxu0 0.0
        %329 = vmatpush1.msra.mxu0 0.0
        %330 = vmatprep.subr.mxu0 0.0
        %331 = vmatpush1.msra.mxu0 0.0
        %332 = vmatprep.subr.mxu0 0.0
        %333 = vmatpush1.msra.mxu0 0.0
        %334 = vmatprep.subr.mxu0 0.0
        %335 = vmatpush1.msra.mxu0 0.0
        %336 = vmatprep.subr.mxu0 0.0
        %337 = vmatpush1.msra.mxu0 0.0
        %338 = vmatprep.subr.mxu0 0.0
        %339 = vmatpush1.msra.mxu0 0.0
        %340 = vmatprep.subr.mxu0 0.0
        %341 = vmatpush1.msra.mxu0 0.0
        %342 = vmatprep.subr.mxu0 0.0
        %343 = vmatpush1.msra.mxu0 0.0
        %344 = vmatprep.subr.mxu0 0.0
        %345 = vmatpush1.msra.mxu0 0.0
        %346 = vmatprep.subr.mxu0 0.0
        %347 = vmatpush1.msra.mxu0 0.0
        %348 = vmatprep.subr.mxu0 0.0
        %349 = vmatpush1.msra.mxu0 0.0
        %350 = vmatprep.subr.mxu0 0.0
        %351 = vmatpush1.msra.mxu0 0.0
        %352 = vmatprep.subr.mxu0 0.0
        %353 = vmatpush1.msra.mxu0 0.0
        %354 = vmatprep.subr.mxu0 0.0
        %355 = vmatpush1.msra.mxu0 0.0
        %356 = vmatprep.subr.mxu0 0.0
        %357 = vmatpush1.msra.mxu0 0.0
        %358 = vmatprep.subr.mxu0 0.0
        %359 = vmatpush1.msra.mxu0 0.0
        %360 = vmatprep.subr.mxu0 0.0
        %361 = vmatpush1.msra.mxu0 0.0
        %362 = vmatprep.mubr.f32.mxu0 0.0
        %363 = vmatmul.mubr.f32.gmra.mrb[0].mxu0 %v292
        %v364 = vpop.f32.mrb[0].mxu0
        %v365 = vadd.f32 %v288, %v364
        %v366 = vpop.f32.mrb[0].mxu0
        %367 = vdwg.mxu0
        %v368 = vmax.f32 %v365, 0.0
        %v369 = vld [vmem:[#allocation7] sm:$0xff]
        %v370 = vld [vmem:[#allocation7 + $0x8] sm:$0xff]
        %v371 = vld [vmem:[#allocation7 + $0x10] sm:$0xff]
        %v372 = vld [vmem:[#allocation7 + $0x18] sm:$0xff]
        %v373 = vld [vmem:[#allocation7 + $0x20] sm:$0xff]
        %v374 = vld [vmem:[#allocation7 + $0x28] sm:$0xff]
        %v375 = vld [vmem:[#allocation7 + $0x30] sm:$0xff]
        %v376 = vld [vmem:[#allocation7 + $0x38] sm:$0xff]
        %v377 = vld [vmem:[#allocation7 + $0x40] sm:$0xff]
        %v378 = vld [vmem:[#allocation7 + $0x48] sm:$0xff]
        %v379 = vld [vmem:[#allocation7 + $0x50] sm:$0xff]
        %v380 = vld [vmem:[#allocation7 + $0x58] sm:$0xff]
        %v381 = vld [vmem:[#allocation7 + $0x60] sm:$0xff]
        %v382 = vld [vmem:[#allocation7 + $0x68] sm:$0xff]
        %v383 = vld [vmem:[#allocation7 + $0x70] sm:$0xff]
        %v384 = vld [vmem:[#allocation7 + $0x78] sm:$0xff]
        %v385 = vld [vmem:[%s4] sm:$0x1]
        %v387 = vlaneseq
        %v388 = vshrl.u32 %v387, 7
        %v389 = vsub.s32 0, %v388
        %v390 = vrot.slane %v385, %v389
        %392 = vmatprep.subr.mxu0 0.0
        %393 = vmatpush1.msra.mxu0 %v369
        %394 = vmatprep.subr.mxu0 0.0
        %395 = vmatpush1.msra.mxu0 %v370
        %396 = vmatprep.subr.mxu0 0.0
        %397 = vmatpush1.msra.mxu0 %v371
        %398 = vmatprep.subr.mxu0 0.0
        %399 = vmatpush1.msra.mxu0 %v372
        %400 = vmatprep.subr.mxu0 0.0
        %401 = vmatpush1.msra.mxu0 %v373
        %402 = vmatprep.subr.mxu0 0.0
        %403 = vmatpush1.msra.mxu0 %v374
        %404 = vmatprep.subr.mxu0 0.0
        %405 = vmatpush1.msra.mxu0 %v375
        %406 = vmatprep.subr.mxu0 0.0
        %407 = vmatpush1.msra.mxu0 %v376
        %408 = vmatprep.subr.mxu0 0.0
        %409 = vmatpush1.msra.mxu0 %v377
        %410 = vmatprep.subr.mxu0 0.0
        %411 = vmatpush1.msra.mxu0 %v378
        %412 = vmatprep.subr.mxu0 0.0
        %413 = vmatpush1.msra.mxu0 %v379
        %414 = vmatprep.subr.mxu0 0.0
        %415 = vmatpush1.msra.mxu0 %v380
        %416 = vmatprep.subr.mxu0 0.0
        %417 = vmatpush1.msra.mxu0 %v381
        %418 = vmatprep.subr.mxu0 0.0
        %419 = vmatpush1.msra.mxu0 %v382
        %420 = vmatprep.subr.mxu0 0.0
        %421 = vmatpush1.msra.mxu0 %v383
        %422 = vmatprep.subr.mxu0 0.0
        %423 = vmatpush1.msra.mxu0 %v384
        %424 = vmatprep.subr.mxu0 0.0
        %425 = vmatpush1.msra.mxu0 0.0
        %426 = vmatprep.subr.mxu0 0.0
        %427 = vmatpush1.msra.mxu0 0.0
        %428 = vmatprep.subr.mxu0 0.0
        %429 = vmatpush1.msra.mxu0 0.0
        %430 = vmatprep.subr.mxu0 0.0
        %431 = vmatpush1.msra.mxu0 0.0
        %432 = vmatprep.subr.mxu0 0.0
        %433 = vmatpush1.msra.mxu0 0.0
        %434 = vmatprep.subr.mxu0 0.0
        %435 = vmatpush1.msra.mxu0 0.0
        %436 = vmatprep.subr.mxu0 0.0
        %437 = vmatpush1.msra.mxu0 0.0
        %438 = vmatprep.subr.mxu0 0.0
        %439 = vmatpush1.msra.mxu0 0.0
        %440 = vmatprep.subr.mxu0 0.0
        %441 = vmatpush1.msra.mxu0 0.0
        %442 = vmatprep.subr.mxu0 0.0
        %443 = vmatpush1.msra.mxu0 0.0
        %444 = vmatprep.subr.mxu0 0.0
        %445 = vmatpush1.msra.mxu0 0.0
        %446 = vmatprep.subr.mxu0 0.0
        %447 = vmatpush1.msra.mxu0 0.0
        %448 = vmatprep.subr.mxu0 0.0
        %449 = vmatpush1.msra.mxu0 0.0
        %450 = vmatprep.subr.mxu0 0.0
        %451 = vmatpush1.msra.mxu0 0.0
        %452 = vmatprep.subr.mxu0 0.0
        %453 = vmatpush1.msra.mxu0 0.0
        %454 = vmatprep.subr.mxu0 0.0
        %455 = vmatpush1.msra.mxu0 0.0
        %456 = vmatprep.mubr.f32.mxu0 0.0
        %457 = vmatmul.mubr.f32.gmra.mrb[0].mxu0 %v368
        %v458 = vpop.f32.mrb[0].mxu0
        %v459 = vadd.f32 %v390, %v458
        %v460 = vpop.f32.mrb[0].mxu0
        %461 = vdwg.mxu0
        %462 = vst [vmem:[%s268] sm:$0xff] %v459
        %s463 = sand.u32 %s141, 1
        %s464 = scalar_lea.sflag [#allocation4], %s463
        %s465 = sand.u32 %s141, 1
        %s466 = smul.addr %s465, 8
        %s467 = scalar_lea.vmem [#allocation8], %s466
        // Predicated region
        $region53: #{tpu_custom_call.1} parent=39 // pred_check
          %p468 = pneg %p151
        $region54: #{tpu_custom_call.1} parent=39 // pred_check_branch
          %470 = sbr.rel (%p468) target = $region56
        $region55: #{tpu_custom_call.1} parent=39 // pred_region
          %s472 = ssub.s32 128, 128
          %473 = vsyncadd %s464, %s472
          %s474 = smul.addr %s23, 128
          %s475 = scalar_lea.hbm %s5, %s474
          %s477 = sshll.u32 %s467, 4
          %s478 = int_to_ptr.vmem [resolvable:$true] %s477
          %480 = dma.vmem_to_hbm [thread:$0]  %s478, 128, %s475, %s464
        $region56: #{tpu_custom_call.1} parent=39 // pred_fallthru
          _
      $region40: #{tpu_custom_call.1} parent=5 // pred_fallthru
        _
      %p481 = scmp.le.s32.totalorder 2, %s18
      // Predicated region
      $region57: #{tpu_custom_call.1} parent=5 // pred_check
        %p482 = pneg %p481
      $region58: #{tpu_custom_call.1} parent=5 // pred_check_branch
        %484 = sbr.rel (%p482) target = $region60
      $region59: #{tpu_custom_call.1} parent=5 // pred_region
        %s485 = ssub.s32 %s18, 2
        // Predicated region
        $region61: #{tpu_custom_call.1} parent=59 // pred_check
          %p486 = pneg %p157
        $region62: #{tpu_custom_call.1} parent=59 // pred_check_branch
          %488 = sbr.rel (%p486) target = $region64
        $region63: #{tpu_custom_call.1} parent=59 // pred_region
          %s489 = sand.u32 %s142, 1
          %s490 = scalar_lea.sflag [#allocation4], %s489
          %s491 = sand.u32 %s142, 1
          %s492 = smul.addr %s491, 8
          %s493 = scalar_lea.vmem [#allocation8], %s492
          %494 = dma.done %s490, 128
        $region64: #{tpu_custom_call.1} parent=59 // pred_fallthru
          _
      $region60: #{tpu_custom_call.1} parent=5 // pred_fallthru
        _
    $region6: #{tpu_custom_call.1} parent=1 // loop_footer
      %s22 = sadd.s32 1, %s18
    $region7: #{tpu_custom_call.1} parent=1 // loop_footer_branch
      %17 = sbr.rel target = $region3
    $region8: #{tpu_custom_call.1} parent=1 // loop_exit
      _
    %495 = vsyncpa [#allocation3], 1
    %s496 = scalar_lea.sflag [#allocation3], 1
    %497 = vsyncpa %s496, 1
    %498 = vsyncpa [#allocation6], 1
    %499 = vsyncpa [#allocation4], 1
    %s500 = scalar_lea.sflag [#allocation4], 1
    %501 = vsyncpa %s500, 1

</llo_original>
